<compile_context>
chip_gen: v7x
topology: tpu7x:2x2x1
jax: 0.10.0
libtpu: 0.0.40
codegen_flags: <defaults>
</compile_context>

<pallas_src>
import functools

import jax
import jax.numpy as jnp
from jax.experimental import pallas as pl
from jax.experimental.pallas import tpu as pltpu

HIDDEN_A = 256        # actor hidden width
HIDDEN_C = 64         # critic hidden width (logical)
HIDDEN_C_PAD = 128    # critic hidden width padded to a full lane tile
W1_OUT = HIDDEN_A + HIDDEN_C_PAD   # 384 : fused layer-1 output width
OUT_W = 128           # lane-dense fused output slab width (policy lanes + value lane)


def _round_up(n, m):
    return ((n + m - 1) // m) * m


def actor_critic_kernel(action_dim,
                        x_ref, w1_ref, b1_ref,
                        aw2_ref, ab2_ref, cw2_ref, cb2_ref,
                        w3_ref, b3_ref,
                        out_ref):
    x = x_ref[...]

    # Fused layer 1: [TB, in] @ [in, 384] -> actor h1 (cols 0..255), critic c1 (cols 256..383).
    z1 = jnp.tanh(jnp.dot(x, w1_ref[...], preferred_element_type=jnp.float32) + b1_ref[...])
    h1 = z1[:, :HIDDEN_A]          # (TB, 256)
    c1 = z1[:, HIDDEN_A:]          # (TB, 128) ; lanes 64..127 are exactly 0

    # Layer 2 (different inputs -> kept separate; critic padded to 128 lanes).
    h2 = jnp.tanh(jnp.dot(h1, aw2_ref[...], preferred_element_type=jnp.float32) + ab2_ref[...])
    c2 = jnp.tanh(jnp.dot(c1, cw2_ref[...], preferred_element_type=jnp.float32) + cb2_ref[...])

    # Fused layer 3: [TB, 384] @ [384, 128].
    #   cols 0..A-1 : actor logits (pre-tanh), col A : critic value, rest : 0.
    cat = jnp.concatenate([h2, c2], axis=-1)
    z3 = jnp.dot(cat, w3_ref[...], preferred_element_type=jnp.float32) + b3_ref[...]

    col = jax.lax.broadcasted_iota(jnp.int32, z3.shape, 1)
    is_pol = col < action_dim

    # Actor head: tanh + numerically-stable masked softmax over the policy lanes.
    logits = jnp.where(is_pol, jnp.tanh(z3), -jnp.inf)
    m = jnp.max(logits, axis=-1, keepdims=True)
    e = jnp.where(is_pol, jnp.exp(logits - m), 0.0)
    denom = jnp.sum(e, axis=-1, keepdims=True)
    policy = e * pl.reciprocal(denom, approx=False)

    # Critic head: raw linear output at lane `action_dim`.
    value_lane = jnp.where(col == action_dim, z3, 0.0)

    out_ref[...] = jnp.where(is_pol, policy, value_lane)


def init_params(key, input_dim, action_dim):
    """PyTorch-style init: U(-1/sqrt(fan_in), 1/sqrt(fan_in)). Weights stored as [in, out]."""
    dims = [
        ("aw1", (input_dim, HIDDEN_A)), ("ab1", (1, HIDDEN_A)),
        ("aw2", (HIDDEN_A, HIDDEN_A)),  ("ab2", (1, HIDDEN_A)),
        ("aw3", (HIDDEN_A, action_dim)), ("ab3", (1, action_dim)),
        ("cw1", (input_dim, HIDDEN_C)), ("cb1", (1, HIDDEN_C)),
        ("cw2", (HIDDEN_C, HIDDEN_C)),  ("cb2", (1, HIDDEN_C)),
        ("cw3", (HIDDEN_C, 1)),         ("cb3", (1, 1)),
    ]
    fan_ins = [input_dim, input_dim, HIDDEN_A, HIDDEN_A, HIDDEN_A, HIDDEN_A,
               input_dim, input_dim, HIDDEN_C, HIDDEN_C, HIDDEN_C, HIDDEN_C]
    params = []
    keys = jax.random.split(key, len(dims))
    for (_, shape), fan_in, k in zip(dims, fan_ins, keys):
        bound = 1.0 / jnp.sqrt(jnp.float32(fan_in))
        params.append(jax.random.uniform(k, shape, jnp.float32, -bound, bound))
    return params


def pack_params(params, action_dim):
    """Fuse / zero-pad the raw PyTorch-layout params into lane-dense kernel weights."""
    (aw1, ab1, aw2, ab2, aw3, ab3, cw1, cb1, cw2, cb2, cw3, cb3) = params
    assert action_dim + 1 <= OUT_W, "action_dim must be < 128 for the fused output slab"
    in_dim = aw1.shape[0]

    # Fused layer 1 (actor 256 | critic 64 -> padded to 128).
    w1 = jnp.zeros((in_dim, W1_OUT), jnp.float32)
    w1 = w1.at[:, :HIDDEN_A].set(aw1).at[:, HIDDEN_A:HIDDEN_A + HIDDEN_C].set(cw1)
    b1 = jnp.zeros((1, W1_OUT), jnp.float32)
    b1 = b1.at[:, :HIDDEN_A].set(ab1).at[:, HIDDEN_A:HIDDEN_A + HIDDEN_C].set(cb1)

    # Critic layer 2 padded 64x64 -> 128x128 (zero padding keeps padded lanes at tanh(0)=0).
    cw2p = jnp.zeros((HIDDEN_C_PAD, HIDDEN_C_PAD), jnp.float32).at[:HIDDEN_C, :HIDDEN_C].set(cw2)
    cb2p = jnp.zeros((1, HIDDEN_C_PAD), jnp.float32).at[:, :HIDDEN_C].set(cb2)

    # Fused layer 3: block structure [[aw3, 0], [0, cw3]] into a (384, 128) slab.
    w3 = jnp.zeros((W1_OUT, OUT_W), jnp.float32)
    w3 = w3.at[:HIDDEN_A, :action_dim].set(aw3)
    w3 = w3.at[HIDDEN_A:HIDDEN_A + HIDDEN_C, action_dim].set(cw3[:, 0])
    b3 = jnp.zeros((1, OUT_W), jnp.float32)
    b3 = b3.at[:, :action_dim].set(ab3).at[:, action_dim].set(cb3[0, 0])

    return (w1, b1, aw2, ab2, cw2p, cb2p, w3, b3)


def actor_critic_forward(x, packed, action_dim):
    w1, b1, aw2, ab2, cw2p, cb2p, w3, b3 = packed
    B, in_dim = x.shape

    # Batch tiling: big enough tiles to amortize per-step overhead; weights stay resident.
    TB = min(256, _round_up(max(B, 1), 8))
    Bp = _round_up(B, TB)
    xp = jnp.pad(x, ((0, Bp - B), (0, 0))) if Bp != B else x
    nb = Bp // TB

    kernel = functools.partial(actor_critic_kernel, action_dim)

    def const_spec(arr):
        return pl.BlockSpec(arr.shape, lambda i: (0, 0))

    out = pl.pallas_call(
        kernel,
        out_shape=jax.ShapeDtypeStruct((Bp, OUT_W), jnp.float32),
        grid=(nb,),
        in_specs=[pl.BlockSpec((TB, in_dim), lambda i: (i, 0)),
                  const_spec(w1), const_spec(b1),
                  const_spec(aw2), const_spec(ab2),
                  const_spec(cw2p), const_spec(cb2p),
                  const_spec(w3), const_spec(b3)],
        out_specs=pl.BlockSpec((TB, OUT_W), lambda i: (i, 0)),
        compiler_params=pltpu.CompilerParams(
            dimension_semantics=("parallel",)),
    )(xp, w1, b1, aw2, ab2, cw2p, cb2p, w3, b3)

    policy = out[:B, :action_dim]
    value = out[:B, action_dim:action_dim + 1]
    return policy, value


def reference_forward(x, params):
    (aw1, ab1, aw2, ab2, aw3, ab3, cw1, cb1, cw2, cb2, cw3, cb3) = params
    h = jnp.tanh(x @ aw1 + ab1)
    h = jnp.tanh(h @ aw2 + ab2)
    logits = jnp.tanh(h @ aw3 + ab3)
    policy = jax.nn.softmax(logits, axis=-1)
    c = jnp.tanh(x @ cw1 + cb1)
    c = jnp.tanh(c @ cw2 + cb2)
    value = c @ cw3 + cb3
    return policy, value


if __name__ == "__main__":
    key = jax.random.PRNGKey(0)
    k_x, k_p = jax.random.split(key)

    batch, input_dim, action_dim = 8, 16, 8
    x = jax.random.normal(k_x, (batch, input_dim), jnp.float32)
    params = init_params(k_p, input_dim, action_dim)
    packed = pack_params(params, action_dim)

    policy, value = actor_critic_forward(x, packed, action_dim)
    policy = jax.block_until_ready(policy)
    value = jax.block_until_ready(value)

    ref_policy, ref_value = reference_forward(x, params)
    assert policy.shape == (batch, action_dim) and value.shape == (batch, 1)
    assert jnp.allclose(policy, ref_policy, atol=1e-5, rtol=1e-5)
    assert jnp.allclose(value, ref_value, atol=1e-5, rtol=1e-5)

    print("KERNEL_OK")
</pallas_src>

<mosaic_0001>
module attributes {stable_mosaic.version = 11 : i64} {
  func.func @actor_critic_kernel(%arg0: i32, %arg1: memref<8x16xf32, #tpu.memory_space<vmem>>, %arg2: memref<16x384xf32, #tpu.memory_space<vmem>>, %arg3: memref<1x384xf32, #tpu.memory_space<vmem>>, %arg4: memref<256x256xf32, #tpu.memory_space<vmem>>, %arg5: memref<1x256xf32, #tpu.memory_space<vmem>>, %arg6: memref<128x128xf32, #tpu.memory_space<vmem>>, %arg7: memref<1x128xf32, #tpu.memory_space<vmem>>, %arg8: memref<384x128xf32, #tpu.memory_space<vmem>>, %arg9: memref<1x128xf32, #tpu.memory_space<vmem>>, %arg10: memref<8x128xf32, #tpu.memory_space<vmem>>) attributes {dimension_semantics = [#tpu.dimension_semantics<parallel>], iteration_bounds = array<i64: 1>, scalar_prefetch = 0 : i64, scratch_operands = 0 : i64, tpu.core_type = #tpu.core_type<tc>, window_params = [{transform_indices = @transform_0, window_bounds = array<i64: 8, 16>}, {pipeline_mode = #tpu.pipeline_mode<synchronous>, transform_indices = @transform_1, window_bounds = array<i64: 16, 384>}, {pipeline_mode = #tpu.pipeline_mode<synchronous>, transform_indices = @transform_2, window_bounds = array<i64: 1, 384>}, {pipeline_mode = #tpu.pipeline_mode<synchronous>, transform_indices = @transform_3, window_bounds = array<i64: 256, 256>}, {pipeline_mode = #tpu.pipeline_mode<synchronous>, transform_indices = @transform_4, window_bounds = array<i64: 1, 256>}, {pipeline_mode = #tpu.pipeline_mode<synchronous>, transform_indices = @transform_5, window_bounds = array<i64: 128, 128>}, {pipeline_mode = #tpu.pipeline_mode<synchronous>, transform_indices = @transform_6, window_bounds = array<i64: 1, 128>}, {pipeline_mode = #tpu.pipeline_mode<synchronous>, transform_indices = @transform_7, window_bounds = array<i64: 384, 128>}, {pipeline_mode = #tpu.pipeline_mode<synchronous>, transform_indices = @transform_8, window_bounds = array<i64: 1, 128>}, {transform_indices = @transform_9, window_bounds = array<i64: 8, 128>}]} {
    %c0 = arith.constant 0 : index
    %c0_0 = arith.constant 0 : index
    %0 = vector.load %arg1[%c0, %c0_0] : memref<8x16xf32, #tpu.memory_space<vmem>>, vector<8x16xf32>
    %c0_1 = arith.constant 0 : index
    %c0_2 = arith.constant 0 : index
    %1 = vector.load %arg2[%c0_1, %c0_2] : memref<16x384xf32, #tpu.memory_space<vmem>>, vector<16x384xf32>
    %cst = arith.constant dense<0.000000e+00> : vector<8x384xf32>
    %2 = tpu.matmul %0, %1, %cst {dimension_numbers = #tpu.dot_dimension_numbers<[1], [0], [0], [1], [0, 0, 1, 1], [], []>} : vector<8x16xf32>, vector<16x384xf32>, vector<8x384xf32> -> vector<8x384xf32>
    %c0_3 = arith.constant 0 : index
    %c0_4 = arith.constant 0 : index
    %3 = vector.load %arg3[%c0_3, %c0_4] : memref<1x384xf32, #tpu.memory_space<vmem>>, vector<1x384xf32>
    %4 = vector.broadcast %3 : vector<1x384xf32> to vector<8x384xf32>
    %5 = arith.addf %2, %4 : vector<8x384xf32>
    %6 = math.tanh %5 : vector<8x384xf32>
    %7 = vector.extract_strided_slice %6 {offsets = [0, 0], sizes = [8, 256], strides = [1, 1]} : vector<8x384xf32> to vector<8x256xf32>
    %8 = vector.extract_strided_slice %6 {offsets = [0, 256], sizes = [8, 128], strides = [1, 1]} : vector<8x384xf32> to vector<8x128xf32>
    %c0_5 = arith.constant 0 : index
    %c0_6 = arith.constant 0 : index
    %9 = vector.load %arg4[%c0_5, %c0_6] : memref<256x256xf32, #tpu.memory_space<vmem>>, vector<256x256xf32>
    %cst_7 = arith.constant dense<0.000000e+00> : vector<8x256xf32>
    %10 = tpu.matmul %7, %9, %cst_7 {dimension_numbers = #tpu.dot_dimension_numbers<[1], [0], [0], [1], [0, 0, 1, 1], [], []>} : vector<8x256xf32>, vector<256x256xf32>, vector<8x256xf32> -> vector<8x256xf32>
    %c0_8 = arith.constant 0 : index
    %c0_9 = arith.constant 0 : index
    %11 = vector.load %arg5[%c0_8, %c0_9] : memref<1x256xf32, #tpu.memory_space<vmem>>, vector<1x256xf32>
    %12 = vector.broadcast %11 : vector<1x256xf32> to vector<8x256xf32>
    %13 = arith.addf %10, %12 : vector<8x256xf32>
    %14 = math.tanh %13 : vector<8x256xf32>
    %c0_10 = arith.constant 0 : index
    %c0_11 = arith.constant 0 : index
    %15 = vector.load %arg6[%c0_10, %c0_11] : memref<128x128xf32, #tpu.memory_space<vmem>>, vector<128x128xf32>
    %cst_12 = arith.constant dense<0.000000e+00> : vector<8x128xf32>
    %16 = tpu.matmul %8, %15, %cst_12 {dimension_numbers = #tpu.dot_dimension_numbers<[1], [0], [0], [1], [0, 0, 1, 1], [], []>} : vector<8x128xf32>, vector<128x128xf32>, vector<8x128xf32> -> vector<8x128xf32>
    %c0_13 = arith.constant 0 : index
    %c0_14 = arith.constant 0 : index
    %17 = vector.load %arg7[%c0_13, %c0_14] : memref<1x128xf32, #tpu.memory_space<vmem>>, vector<1x128xf32>
    %18 = vector.broadcast %17 : vector<1x128xf32> to vector<8x128xf32>
    %19 = arith.addf %16, %18 : vector<8x128xf32>
    %20 = math.tanh %19 : vector<8x128xf32>
    %21 = tpu.concatenate %14, %20 in 1 : vector<8x256xf32>, vector<8x128xf32> -> vector<8x384xf32>
    %c0_15 = arith.constant 0 : index
    %c0_16 = arith.constant 0 : index
    %22 = vector.load %arg8[%c0_15, %c0_16] : memref<384x128xf32, #tpu.memory_space<vmem>>, vector<384x128xf32>
    %cst_17 = arith.constant dense<0.000000e+00> : vector<8x128xf32>
    %23 = tpu.matmul %21, %22, %cst_17 {dimension_numbers = #tpu.dot_dimension_numbers<[1], [0], [0], [1], [0, 0, 1, 1], [], []>} : vector<8x384xf32>, vector<384x128xf32>, vector<8x128xf32> -> vector<8x128xf32>
    %c0_18 = arith.constant 0 : index
    %c0_19 = arith.constant 0 : index
    %24 = vector.load %arg9[%c0_18, %c0_19] : memref<1x128xf32, #tpu.memory_space<vmem>>, vector<1x128xf32>
    %25 = vector.broadcast %24 : vector<1x128xf32> to vector<8x128xf32>
    %26 = arith.addf %23, %25 : vector<8x128xf32>
    %27 = tpu.iota {dimensions = array<i32: 1>} : vector<8x128xi32>
    %c8_i32 = arith.constant 8 : i32
    %28 = vector.broadcast %c8_i32 : i32 to vector<8x128xi32>
    %29 = arith.cmpi slt, %27, %28 : vector<8x128xi32>
    %30 = math.tanh %26 : vector<8x128xf32>
    %cst_20 = arith.constant 0xFF800000 : f32
    %31 = vector.broadcast %cst_20 : f32 to vector<8x128xf32>
    %32 = arith.select %29, %30, %31 : vector<8x128xi1>, vector<8x128xf32>
    %cst_21 = arith.constant dense<0xFF800000> : vector<8xf32>
    %33 = vector.multi_reduction <maximumf>, %32, %cst_21 [1] : vector<8x128xf32> to vector<8xf32>
    %34 = vector.shape_cast %33 : vector<8xf32> to vector<8x1xf32>
    %35 = vector.broadcast %34 : vector<8x1xf32> to vector<8x128xf32>
    %36 = arith.subf %32, %35 : vector<8x128xf32>
    %37 = math.exp %36 : vector<8x128xf32>
    %cst_22 = arith.constant 0.000000e+00 : f32
    %38 = vector.broadcast %cst_22 : f32 to vector<8x128xf32>
    %39 = arith.select %29, %37, %38 : vector<8x128xi1>, vector<8x128xf32>
    %cst_23 = arith.constant dense<0.000000e+00> : vector<8xf32>
    %40 = vector.multi_reduction <add>, %39, %cst_23 [1] : vector<8x128xf32> to vector<8xf32>
    %41 = vector.shape_cast %40 : vector<8xf32> to vector<8x1xf32>
    %42 = tpu.reciprocal %41 : vector<8x1xf32> -> vector<8x1xf32>
    %43 = vector.broadcast %42 : vector<8x1xf32> to vector<8x128xf32>
    %44 = arith.mulf %39, %43 : vector<8x128xf32>
    %c8_i32_24 = arith.constant 8 : i32
    %45 = vector.broadcast %c8_i32_24 : i32 to vector<8x128xi32>
    %46 = arith.cmpi eq, %27, %45 : vector<8x128xi32>
    %cst_25 = arith.constant 0.000000e+00 : f32
    %47 = vector.broadcast %cst_25 : f32 to vector<8x128xf32>
    %48 = arith.select %46, %26, %47 : vector<8x128xi1>, vector<8x128xf32>
    %49 = arith.select %29, %44, %48 : vector<8x128xi1>, vector<8x128xf32>
    %c0_26 = arith.constant 0 : index
    %c0_27 = arith.constant 0 : index
    %50 = vector.load %arg10[%c0_26, %c0_27] : memref<8x128xf32, #tpu.memory_space<vmem>>, vector<8x128xf32>
    tpu.vector_store %arg10[%c0_26, %c0_27], %49 {strides = array<i32>} : memref<8x128xf32, #tpu.memory_space<vmem>>, vector<8x128xf32>,
    return
  }
  func.func @transform_0(%arg0: i32) -> (i32, i32) {
    %c0_i32 = arith.constant 0 : i32
    %c0_i32_0 = arith.constant 0 : i32
    return %arg0, %c0_i32 : i32, i32
  }
  func.func @transform_1(%arg0: i32) -> (i32, i32) {
    %c0_i32 = arith.constant 0 : i32
    %c0_i32_0 = arith.constant 0 : i32
    %c0_i32_1 = arith.constant 0 : i32
    return %c0_i32, %c0_i32_0 : i32, i32
  }
  func.func @transform_2(%arg0: i32) -> (i32, i32) {
    %c0_i32 = arith.constant 0 : i32
    %c0_i32_0 = arith.constant 0 : i32
    %c0_i32_1 = arith.constant 0 : i32
    return %c0_i32, %c0_i32_0 : i32, i32
  }
  func.func @transform_3(%arg0: i32) -> (i32, i32) {
    %c0_i32 = arith.constant 0 : i32
    %c0_i32_0 = arith.constant 0 : i32
    %c0_i32_1 = arith.constant 0 : i32
    return %c0_i32, %c0_i32_0 : i32, i32
  }
  func.func @transform_4(%arg0: i32) -> (i32, i32) {
    %c0_i32 = arith.constant 0 : i32
    %c0_i32_0 = arith.constant 0 : i32
    %c0_i32_1 = arith.constant 0 : i32
    return %c0_i32, %c0_i32_0 : i32, i32
  }
  func.func @transform_5(%arg0: i32) -> (i32, i32) {
    %c0_i32 = arith.constant 0 : i32
    %c0_i32_0 = arith.constant 0 : i32
    %c0_i32_1 = arith.constant 0 : i32
    return %c0_i32, %c0_i32_0 : i32, i32
  }
  func.func @transform_6(%arg0: i32) -> (i32, i32) {
    %c0_i32 = arith.constant 0 : i32
    %c0_i32_0 = arith.constant 0 : i32
    %c0_i32_1 = arith.constant 0 : i32
    return %c0_i32, %c0_i32_0 : i32, i32
  }
  func.func @transform_7(%arg0: i32) -> (i32, i32) {
    %c0_i32 = arith.constant 0 : i32
    %c0_i32_0 = arith.constant 0 : i32
    %c0_i32_1 = arith.constant 0 : i32
    return %c0_i32, %c0_i32_0 : i32, i32
  }
  func.func @transform_8(%arg0: i32) -> (i32, i32) {
    %c0_i32 = arith.constant 0 : i32
    %c0_i32_0 = arith.constant 0 : i32
    %c0_i32_1 = arith.constant 0 : i32
    return %c0_i32, %c0_i32_0 : i32, i32
  }
  func.func @transform_9(%arg0: i32) -> (i32, i32) {
    %c0_i32 = arith.constant 0 : i32
    %c0_i32_0 = arith.constant 0 : i32
    return %arg0, %c0_i32 : i32, i32
  }
}

</mosaic_0001>

<llo_original>
// kernel: tpu_custom_call.1
$region0: #{tpu_custom_call.1}
  #allocation0 [shape = 'u32[]', space=smem, size = 0x4, offset = 0x4, fixed_abs, tag = 'smem constant byte address 0x4 - core index']
  #allocation1 [shape = 'u32[144,128]{1,0:T(1,128)}', space=vmem, size = 0x12000, scoped, tag = 'internal scratch']
  %s0 = inlined_call_operand.hbm [shape: f32[8,16], index: 0, kind: input, shape index: {}]
  %s1 = inlined_call_operand.hbm [shape: f32[16,384], index: 1, kind: input, shape index: {}]
  %s2 = inlined_call_operand.vmem [shape: f32[1,384], index: 2, kind: input, shape index: {}]
  %s3 = inlined_call_operand.hbm [shape: f32[256,256], index: 3, kind: input, shape index: {}]
  %s4 = inlined_call_operand.vmem [shape: f32[1,256], index: 4, kind: input, shape index: {}]
  %s5 = inlined_call_operand.hbm [shape: f32[128,128], index: 5, kind: input, shape index: {}]
  %s6 = inlined_call_operand.vmem [shape: f32[1,128], index: 6, kind: input, shape index: {}]
  %s7 = inlined_call_operand.hbm [shape: f32[384,128], index: 7, kind: input, shape index: {}]
  %s8 = inlined_call_operand.vmem [shape: f32[1,128], index: 8, kind: input, shape index: {}]
  %s9 = inlined_call_operand.hbm [shape: f32[8,128], index: 9, kind: output, shape index: {}]
  %s10 = sld [smem:[#allocation0]]
  $region66: #{tpu_custom_call.1} parent=0
    _
  %s12 = ssub.s32 1, %s10
  %s13 = scalar_select 0, %s12, %s10
  $region1: #{tpu_custom_call.1} parent=0
    #allocation2 [shape = 'u8[4096]{0}', space=vmem, size = 0x1000, scoped, tag = 'input window, operand 0, single buffered']
    #allocation3 [shape = 's32[1]{0}', space=sflag, size = 0x4, scoped, tag = 'scoped memory for tpu_custom_call.1']
    #allocation4 [shape = 's32[1]{0}', space=sflag, size = 0x4, scoped, tag = 'scoped memory for tpu_custom_call.1']
    #allocation5 [shape = 'u8[24576]{0}', space=vmem, size = 0x6000, scoped, tag = 'input window, operand 1, single buffered']
    #allocation6 [shape = 's32[1]{0}', space=sflag, size = 0x4, scoped, tag = 'scoped memory for tpu_custom_call.1']
    #allocation7 [shape = 'u8[262144]{0}', space=vmem, size = 0x40000, scoped, tag = 'input window, operand 3, single buffered']
    #allocation8 [shape = 'u8[65536]{0}', space=vmem, size = 0x10000, scoped, tag = 'input window, operand 5, single buffered']
    #allocation9 [shape = 's32[1]{0}', space=sflag, size = 0x4, scoped, tag = 'scoped memory for tpu_custom_call.1']
    #allocation10 [shape = 'u8[196608]{0}', space=vmem, size = 0x30000, scoped, tag = 'input window, operand 7, single buffered']
    #allocation11 [shape = 'u8[4096]{0}', space=vmem, size = 0x1000, scoped, tag = 'output window, operand 0, single buffered']
    %14 = vsyncpa [#allocation3], 0
    %15 = vsyncpa [#allocation6], 0
    %16 = vsyncpa [#allocation9], 0
    %17 = vsyncpa [#allocation4], 0
    // Predicated region
    $region2: #{tpu_custom_call.1} parent=1 // pred_check
      _
    $region3: #{tpu_custom_call.1} parent=1 // pred_check_branch
      %19 = sbr.rel (0) target = $region5
    $region4: #{tpu_custom_call.1} parent=1 // pred_region
      %s21 = ssub.s32 128, 128
      %22 = vsyncadd [#allocation3], %s21
      %s24 = sshll.u32 [#allocation2], 4
      %s25 = int_to_ptr.vmem [resolvable:$true] %s24
      %27 = dma.hbm_to_vmem [thread:$0]  %s0, 128, %s25, [#allocation3]
    $region5: #{tpu_custom_call.1} parent=1 // pred_fallthru
      _
    // Predicated region
    $region6: #{tpu_custom_call.1} parent=1 // pred_check
      _
    $region7: #{tpu_custom_call.1} parent=1 // pred_check_branch
      %29 = sbr.rel (0) target = $region9
    $region8: #{tpu_custom_call.1} parent=1 // pred_region
      %s31 = ssub.s32 768, 768
      %32 = vsyncadd [#allocation6], %s31
      %s33 = sshll.u32 [#allocation5], 4
      %s34 = int_to_ptr.vmem [resolvable:$true] %s33
      %39 = dma.hbm_to_vmem [thread:$0]  %s1, 768, %s34, [#allocation6], 384, 384, 24
    $region9: #{tpu_custom_call.1} parent=1 // pred_fallthru
      _
    // Predicated region
    $region10: #{tpu_custom_call.1} parent=1 // pred_check
      _
    $region11: #{tpu_custom_call.1} parent=1 // pred_check_branch
      %41 = sbr.rel (0) target = $region13
    $region12: #{tpu_custom_call.1} parent=1 // pred_region
      _
    $region13: #{tpu_custom_call.1} parent=1 // pred_fallthru
      _
    // Predicated region
    $region14: #{tpu_custom_call.1} parent=1 // pred_check
      _
    $region15: #{tpu_custom_call.1} parent=1 // pred_check_branch
      %43 = sbr.rel (0) target = $region17
    $region16: #{tpu_custom_call.1} parent=1 // pred_region
      %s45 = ssub.s32 8192, 8192
      %46 = vsyncadd [#allocation6], %s45
      %s47 = sshll.u32 [#allocation7], 4
      %s48 = int_to_ptr.vmem [resolvable:$true] %s47
      %53 = dma.hbm_to_vmem [thread:$0]  %s3, 8192, %s48, [#allocation6], 256, 256, 16
    $region17: #{tpu_custom_call.1} parent=1 // pred_fallthru
      _
    // Predicated region
    $region18: #{tpu_custom_call.1} parent=1 // pred_check
      _
    $region19: #{tpu_custom_call.1} parent=1 // pred_check_branch
      %55 = sbr.rel (0) target = $region21
    $region20: #{tpu_custom_call.1} parent=1 // pred_region
      _
    $region21: #{tpu_custom_call.1} parent=1 // pred_fallthru
      _
    // Predicated region
    $region22: #{tpu_custom_call.1} parent=1 // pred_check
      _
    $region23: #{tpu_custom_call.1} parent=1 // pred_check_branch
      %57 = sbr.rel (0) target = $region25
    $region24: #{tpu_custom_call.1} parent=1 // pred_region
      %s59 = ssub.s32 2048, 2048
      %60 = vsyncadd [#allocation9], %s59
      %s61 = sshll.u32 [#allocation8], 4
      %s62 = int_to_ptr.vmem [resolvable:$true] %s61
      %67 = dma.hbm_to_vmem [thread:$0]  %s5, 2048, %s62, [#allocation9], 128, 128, 8
    $region25: #{tpu_custom_call.1} parent=1 // pred_fallthru
      _
    // Predicated region
    $region26: #{tpu_custom_call.1} parent=1 // pred_check
      _
    $region27: #{tpu_custom_call.1} parent=1 // pred_check_branch
      %69 = sbr.rel (0) target = $region29
    $region28: #{tpu_custom_call.1} parent=1 // pred_region
      _
    $region29: #{tpu_custom_call.1} parent=1 // pred_fallthru
      _
    // Predicated region
    $region30: #{tpu_custom_call.1} parent=1 // pred_check
      _
    $region31: #{tpu_custom_call.1} parent=1 // pred_check_branch
      %71 = sbr.rel (0) target = $region33
    $region32: #{tpu_custom_call.1} parent=1 // pred_region
      %s73 = ssub.s32 6144, 6144
      %74 = vsyncadd [#allocation9], %s73
      %s75 = sshll.u32 [#allocation10], 4
      %s76 = int_to_ptr.vmem [resolvable:$true] %s75
      %81 = dma.hbm_to_vmem [thread:$0]  %s7, 6144, %s76, [#allocation9], 128, 128, 8
    $region33: #{tpu_custom_call.1} parent=1 // pred_fallthru
      _
    // Predicated region
    $region34: #{tpu_custom_call.1} parent=1 // pred_check
      _
    $region35: #{tpu_custom_call.1} parent=1 // pred_check_branch
      %83 = sbr.rel (0) target = $region37
    $region36: #{tpu_custom_call.1} parent=1 // pred_region
      _
    $region37: #{tpu_custom_call.1} parent=1 // pred_fallthru
      _
    // Predicated region
    $region38: #{tpu_custom_call.1} parent=1 // pred_check
      _
    $region39: #{tpu_custom_call.1} parent=1 // pred_check_branch
      %85 = sbr.rel (0) target = $region41
    $region40: #{tpu_custom_call.1} parent=1 // pred_region
      %86 = dma.done [#allocation3], 128
    $region41: #{tpu_custom_call.1} parent=1 // pred_fallthru
      _
    // Predicated region
    $region42: #{tpu_custom_call.1} parent=1 // pred_check
      _
    $region43: #{tpu_custom_call.1} parent=1 // pred_check_branch
      %88 = sbr.rel (0) target = $region45
    $region44: #{tpu_custom_call.1} parent=1 // pred_region
      %89 = dma.done [#allocation6], 768
    $region45: #{tpu_custom_call.1} parent=1 // pred_fallthru
      _
    // Predicated region
    $region46: #{tpu_custom_call.1} parent=1 // pred_check
      _
    $region47: #{tpu_custom_call.1} parent=1 // pred_check_branch
      %91 = sbr.rel (0) target = $region49
    $region48: #{tpu_custom_call.1} parent=1 // pred_region
      %92 = dma.done [#allocation6], 8192
    $region49: #{tpu_custom_call.1} parent=1 // pred_fallthru
      _
    // Predicated region
    $region50: #{tpu_custom_call.1} parent=1 // pred_check
      _
    $region51: #{tpu_custom_call.1} parent=1 // pred_check_branch
      %94 = sbr.rel (0) target = $region53
    $region52: #{tpu_custom_call.1} parent=1 // pred_region
      %95 = dma.done [#allocation9], 2048
    $region53: #{tpu_custom_call.1} parent=1 // pred_fallthru
      _
    // Predicated region
    $region54: #{tpu_custom_call.1} parent=1 // pred_check
      _
    $region55: #{tpu_custom_call.1} parent=1 // pred_check_branch
      %97 = sbr.rel (0) target = $region57
    $region56: #{tpu_custom_call.1} parent=1 // pred_region
      %98 = dma.done [#allocation9], 6144
    $region57: #{tpu_custom_call.1} parent=1 // pred_fallthru
      _
    %v99 = vld [vmem:[#allocation2] sm:$0xff]
    %v100 = vld [vmem:[#allocation5] sm:$0xff]
    %v101 = vld [vmem:[#allocation5 + $0x8] sm:$0xff]
    %v102 = vld [vmem:[#allocation5 + $0x10] sm:$0xff]
    %v103 = vld [vmem:[#allocation5 + $0x18] sm:$0xff]
    %v104 = vld [vmem:[#allocation5 + $0x20] sm:$0xff]
    %v105 = vld [vmem:[#allocation5 + $0x28] sm:$0xff]
    %v106 = vld [vmem:[%s2] sm:$0x7]
    %v108 = vlaneseq
    %v109 = vshrl.u32 %v108, 7
    %v110 = vsub.s32 0, %v109
    %v111 = vrot.slane %v106, %v110
    %v112 = vlaneseq
    %v113 = vshrl.u32 %v112, 7
    %v114 = vsub.s32 1, %v113
    %v115 = vrot.slane %v106, %v114
    %v116 = vlaneseq
    %v117 = vshrl.u32 %v116, 7
    %v118 = vsub.s32 2, %v117
    %v119 = vrot.slane %v106, %v118
    %vm123 = vcmask 130048
    %v125 = vsel %vm123, %v99, 0
    %127 = vmatprep.subr.mxu0 %v101
    %128 = vmatpush1.msra.mxu0 %v100
    %129 = vmatprep.subr.mxu0 %v104
    %130 = vmatpush1.msra.mxu0 %v103
    %131 = vmatprep.subr.mxu0 0.0
    %132 = vmatpush1.msra.mxu0 0.0
    %133 = vmatprep.subr.mxu0 0.0
    %134 = vmatpush1.msra.mxu0 0.0
    %135 = vmatprep.subr.mxu0 0.0
    %136 = vmatpush1.msra.mxu0 0.0
    %137 = vmatprep.subr.mxu0 0.0
    %138 = vmatpush1.msra.mxu0 0.0
    %139 = vmatprep.subr.mxu0 0.0
    %140 = vmatpush1.msra.mxu0 0.0
    %141 = vmatprep.subr.mxu0 0.0
    %142 = vmatpush1.msra.mxu0 0.0
    %143 = vmatprep.subr.mxu0 0.0
    %144 = vmatpush1.msra.mxu0 0.0
    %145 = vmatprep.subr.mxu0 0.0
    %146 = vmatpush1.msra.mxu0 0.0
    %147 = vmatprep.subr.mxu0 0.0
    %148 = vmatpush1.msra.mxu0 0.0
    %149 = vmatprep.subr.mxu0 0.0
    %150 = vmatpush1.msra.mxu0 0.0
    %151 = vmatprep.subr.mxu0 0.0
    %152 = vmatpush1.msra.mxu0 0.0
    %153 = vmatprep.subr.mxu0 0.0
    %154 = vmatpush1.msra.mxu0 0.0
    %155 = vmatprep.subr.mxu0 0.0
    %156 = vmatpush1.msra.mxu0 0.0
    %157 = vmatprep.subr.mxu0 0.0
    %158 = vmatpush1.msra.mxu0 0.0
    %159 = vmatprep.subr.mxu0 0.0
    %160 = vmatpush1.msra.mxu0 0.0
    %161 = vmatprep.subr.mxu0 0.0
    %162 = vmatpush1.msra.mxu0 0.0
    %163 = vmatprep.subr.mxu0 0.0
    %164 = vmatpush1.msra.mxu0 0.0
    %165 = vmatprep.subr.mxu0 0.0
    %166 = vmatpush1.msra.mxu0 0.0
    %167 = vmatprep.subr.mxu0 0.0
    %168 = vmatpush1.msra.mxu0 0.0
    %169 = vmatprep.subr.mxu0 0.0
    %170 = vmatpush1.msra.mxu0 0.0
    %171 = vmatprep.subr.mxu0 0.0
    %172 = vmatpush1.msra.mxu0 0.0
    %173 = vmatprep.subr.mxu0 0.0
    %174 = vmatpush1.msra.mxu0 0.0
    %175 = vmatprep.subr.mxu0 0.0
    %176 = vmatpush1.msra.mxu0 0.0
    %177 = vmatprep.subr.mxu0 0.0
    %178 = vmatpush1.msra.mxu0 0.0
    %179 = vmatprep.subr.mxu0 0.0
    %180 = vmatpush1.msra.mxu0 0.0
    %181 = vmatprep.subr.mxu0 0.0
    %182 = vmatpush1.msra.mxu0 0.0
    %183 = vmatprep.subr.mxu0 0.0
    %184 = vmatpush1.msra.mxu0 0.0
    %185 = vmatprep.subr.mxu0 0.0
    %186 = vmatpush1.msra.mxu0 0.0
    %187 = vmatprep.subr.mxu0 0.0
    %188 = vmatpush1.msra.mxu0 0.0
    %189 = vmatprep.subr.mxu0 0.0
    %190 = vmatpush1.msra.mxu0 0.0
    %191 = vmatprep.mubr.f32.mxu0 0.0
    %192 = vmatmul.mubr.f32.gmra.mrb[0].mxu0 %v125
    %v193 = vpop.f32.mrb[0].mxu0
    %v194 = vadd.f32 %v111, %v193
    %v195 = vpop.f32.mrb[0].mxu0
    %v196 = vadd.f32 %v115, %v195
    %197 = vdwg.mxu0
    %198 = vmatprep.subr.mxu0 0.0
    %199 = vmatpush1.msra.mxu0 %v102
    %200 = vmatprep.subr.mxu0 0.0
    %201 = vmatpush1.msra.mxu0 %v105
    %202 = vmatprep.subr.mxu0 0.0
    %203 = vmatpush1.msra.mxu0 0.0
    %204 = vmatprep.subr.mxu0 0.0
    %205 = vmatpush1.msra.mxu0 0.0
    %206 = vmatprep.subr.mxu0 0.0
    %207 = vmatpush1.msra.mxu0 0.0
    %208 = vmatprep.subr.mxu0 0.0
    %209 = vmatpush1.msra.mxu0 0.0
    %210 = vmatprep.subr.mxu0 0.0
    %211 = vmatpush1.msra.mxu0 0.0
    %212 = vmatprep.subr.mxu0 0.0
    %213 = vmatpush1.msra.mxu0 0.0
    %214 = vmatprep.subr.mxu0 0.0
    %215 = vmatpush1.msra.mxu0 0.0
    %216 = vmatprep.subr.mxu0 0.0
    %217 = vmatpush1.msra.mxu0 0.0
    %218 = vmatprep.subr.mxu0 0.0
    %219 = vmatpush1.msra.mxu0 0.0
    %220 = vmatprep.subr.mxu0 0.0
    %221 = vmatpush1.msra.mxu0 0.0
    %222 = vmatprep.subr.mxu0 0.0
    %223 = vmatpush1.msra.mxu0 0.0
    %224 = vmatprep.subr.mxu0 0.0
    %225 = vmatpush1.msra.mxu0 0.0
    %226 = vmatprep.subr.mxu0 0.0
    %227 = vmatpush1.msra.mxu0 0.0
    %228 = vmatprep.subr.mxu0 0.0
    %229 = vmatpush1.msra.mxu0 0.0
    %230 = vmatprep.subr.mxu0 0.0
    %231 = vmatpush1.msra.mxu0 0.0
    %232 = vmatprep.subr.mxu0 0.0
    %233 = vmatpush1.msra.mxu0 0.0
    %234 = vmatprep.subr.mxu0 0.0
    %235 = vmatpush1.msra.mxu0 0.0
    %236 = vmatprep.subr.mxu0 0.0
    %237 = vmatpush1.msra.mxu0 0.0
    %238 = vmatprep.subr.mxu0 0.0
    %239 = vmatpush1.msra.mxu0 0.0
    %240 = vmatprep.subr.mxu0 0.0
    %241 = vmatpush1.msra.mxu0 0.0
    %242 = vmatprep.subr.mxu0 0.0
    %243 = vmatpush1.msra.mxu0 0.0
    %244 = vmatprep.subr.mxu0 0.0
    %245 = vmatpush1.msra.mxu0 0.0
    %246 = vmatprep.subr.mxu0 0.0
    %247 = vmatpush1.msra.mxu0 0.0
    %248 = vmatprep.subr.mxu0 0.0
    %249 = vmatpush1.msra.mxu0 0.0
    %250 = vmatprep.subr.mxu0 0.0
    %251 = vmatpush1.msra.mxu0 0.0
    %252 = vmatprep.subr.mxu0 0.0
    %253 = vmatpush1.msra.mxu0 0.0
    %254 = vmatprep.subr.mxu0 0.0
    %255 = vmatpush1.msra.mxu0 0.0
    %256 = vmatprep.subr.mxu0 0.0
    %257 = vmatpush1.msra.mxu0 0.0
    %258 = vmatprep.subr.mxu0 0.0
    %259 = vmatpush1.msra.mxu0 0.0
    %260 = vmatprep.subr.mxu0 0.0
    %261 = vmatpush1.msra.mxu0 0.0
    %262 = vmatprep.mubr.f32.mxu0 0.0
    %263 = vmatmul.mubr.f32.gmra.mrb[0].mxu0 %v125
    %v264 = vpop.f32.mrb[0].mxu0
    %v265 = vadd.f32 %v119, %v264
    %v266 = vpop.f32.mrb[0].mxu0
    %267 = vdwg.mxu0
    %v268 = vtanh.pop %v194
    %v269 = vtanh.pop %v196
    %v270 = vtanh.pop %v265
    %v271 = vld [vmem:[#allocation7] sm:$0xff]
    %v272 = vld [vmem:[#allocation7 + $0x8] sm:$0xff]
    %v273 = vld [vmem:[#allocation7 + $0x10] sm:$0xff]
    %v274 = vld [vmem:[#allocation7 + $0x18] sm:$0xff]
    %v275 = vld [vmem:[#allocation7 + $0x20] sm:$0xff]
    %v276 = vld [vmem:[#allocation7 + $0x28] sm:$0xff]
    %v277 = vld [vmem:[#allocation7 + $0x30] sm:$0xff]
    %v278 = vld [vmem:[#allocation7 + $0x38] sm:$0xff]
    %v279 = vld [vmem:[#allocation7 + $0x40] sm:$0xff]
    %v280 = vld [vmem:[#allocation7 + $0x48] sm:$0xff]
    %v281 = vld [vmem:[#allocation7 + $0x50] sm:$0xff]
    %v282 = vld [vmem:[#allocation7 + $0x58] sm:$0xff]
    %v283 = vld [vmem:[#allocation7 + $0x60] sm:$0xff]
    %v284 = vld [vmem:[#allocation7 + $0x68] sm:$0xff]
    %v285 = vld [vmem:[#allocation7 + $0x70] sm:$0xff]
    %v286 = vld [vmem:[#allocation7 + $0x78] sm:$0xff]
    %v287 = vld [vmem:[#allocation7 + $0x80] sm:$0xff]
    %v288 = vld [vmem:[#allocation7 + $0x88] sm:$0xff]
    %v289 = vld [vmem:[#allocation7 + $0x90] sm:$0xff]
    %v290 = vld [vmem:[#allocation7 + $0x98] sm:$0xff]
    %v291 = vld [vmem:[#allocation7 + $0xa0] sm:$0xff]
    %v292 = vld [vmem:[#allocation7 + $0xa8] sm:$0xff]
    %v293 = vld [vmem:[#allocation7 + $0xb0] sm:$0xff]
    %v294 = vld [vmem:[#allocation7 + $0xb8] sm:$0xff]
    %v295 = vld [vmem:[#allocation7 + $0xc0] sm:$0xff]
    %v296 = vld [vmem:[#allocation7 + $0xc8] sm:$0xff]
    %v297 = vld [vmem:[#allocation7 + $0xd0] sm:$0xff]
    %v298 = vld [vmem:[#allocation7 + $0xd8] sm:$0xff]
    %v299 = vld [vmem:[#allocation7 + $0xe0] sm:$0xff]
    %v300 = vld [vmem:[#allocation7 + $0xe8] sm:$0xff]
    %v301 = vld [vmem:[#allocation7 + $0xf0] sm:$0xff]
    %v302 = vld [vmem:[#allocation7 + $0xf8] sm:$0xff]
    %v303 = vld [vmem:[#allocation7 + $0x100] sm:$0xff]
    %v304 = vld [vmem:[#allocation7 + $0x108] sm:$0xff]
    %v305 = vld [vmem:[#allocation7 + $0x110] sm:$0xff]
    %v306 = vld [vmem:[#allocation7 + $0x118] sm:$0xff]
    %v307 = vld [vmem:[#allocation7 + $0x120] sm:$0xff]
    %v308 = vld [vmem:[#allocation7 + $0x128] sm:$0xff]
    %v309 = vld [vmem:[#allocation7 + $0x130] sm:$0xff]
    %v310 = vld [vmem:[#allocation7 + $0x138] sm:$0xff]
    %v311 = vld [vmem:[#allocation7 + $0x140] sm:$0xff]
    %v312 = vld [vmem:[#allocation7 + $0x148] sm:$0xff]
    %v313 = vld [vmem:[#allocation7 + $0x150] sm:$0xff]
    %v314 = vld [vmem:[#allocation7 + $0x158] sm:$0xff]
    %v315 = vld [vmem:[#allocation7 + $0x160] sm:$0xff]
    %v316 = vld [vmem:[#allocation7 + $0x168] sm:$0xff]
    %v317 = vld [vmem:[#allocation7 + $0x170] sm:$0xff]
    %v318 = vld [vmem:[#allocation7 + $0x178] sm:$0xff]
    %v319 = vld [vmem:[#allocation7 + $0x180] sm:$0xff]
    %v320 = vld [vmem:[#allocation7 + $0x188] sm:$0xff]
    %v321 = vld [vmem:[#allocation7 + $0x190] sm:$0xff]
    %v322 = vld [vmem:[#allocation7 + $0x198] sm:$0xff]
    %v323 = vld [vmem:[#allocation7 + $0x1a0] sm:$0xff]
    %v324 = vld [vmem:[#allocation7 + $0x1a8] sm:$0xff]
    %v325 = vld [vmem:[#allocation7 + $0x1b0] sm:$0xff]
    %v326 = vld [vmem:[#allocation7 + $0x1b8] sm:$0xff]
    %v327 = vld [vmem:[#allocation7 + $0x1c0] sm:$0xff]
    %v328 = vld [vmem:[#allocation7 + $0x1c8] sm:$0xff]
    %v329 = vld [vmem:[#allocation7 + $0x1d0] sm:$0xff]
    %v330 = vld [vmem:[#allocation7 + $0x1d8] sm:$0xff]
    %v331 = vld [vmem:[#allocation7 + $0x1e0] sm:$0xff]
    %v332 = vld [vmem:[#allocation7 + $0x1e8] sm:$0xff]
    %v333 = vld [vmem:[#allocation7 + $0x1f0] sm:$0xff]
    %v334 = vld [vmem:[#allocation7 + $0x1f8] sm:$0xff]
    %v335 = vld [vmem:[%s4] sm:$0x3]
    %v337 = vlaneseq
    %v338 = vshrl.u32 %v337, 7
    %v339 = vsub.s32 0, %v338
    %v340 = vrot.slane %v335, %v339
    %v341 = vlaneseq
    %v342 = vshrl.u32 %v341, 7
    %v343 = vsub.s32 1, %v342
    %v344 = vrot.slane %v335, %v343
    %347 = vmatprep.subr.mxu0 %v272
    %348 = vmatpush1.msra.mxu0 %v271
    %349 = vmatprep.subr.mxu0 %v274
    %350 = vmatpush1.msra.mxu0 %v273
    %351 = vmatprep.subr.mxu0 %v276
    %352 = vmatpush1.msra.mxu0 %v275
    %353 = vmatprep.subr.mxu0 %v278
    %354 = vmatpush1.msra.mxu0 %v277
    %355 = vmatprep.subr.mxu0 %v280
    %356 = vmatpush1.msra.mxu0 %v279
    %357 = vmatprep.subr.mxu0 %v282
    %358 = vmatpush1.msra.mxu0 %v281
    %359 = vmatprep.subr.mxu0 %v284
    %360 = vmatpush1.msra.mxu0 %v283
    %361 = vmatprep.subr.mxu0 %v286
    %362 = vmatpush1.msra.mxu0 %v285
    %363 = vmatprep.subr.mxu0 %v288
    %364 = vmatpush1.msra.mxu0 %v287
    %365 = vmatprep.subr.mxu0 %v290
    %366 = vmatpush1.msra.mxu0 %v289
    %367 = vmatprep.subr.mxu0 %v292
    %368 = vmatpush1.msra.mxu0 %v291
    %369 = vmatprep.subr.mxu0 %v294
    %370 = vmatpush1.msra.mxu0 %v293
    %371 = vmatprep.subr.mxu0 %v296
    %372 = vmatpush1.msra.mxu0 %v295
    %373 = vmatprep.subr.mxu0 %v298
    %374 = vmatpush1.msra.mxu0 %v297
    %375 = vmatprep.subr.mxu0 %v300
    %376 = vmatpush1.msra.mxu0 %v299
    %377 = vmatprep.subr.mxu0 %v302
    %378 = vmatpush1.msra.mxu0 %v301
    %379 = vmatprep.subr.mxu0 %v304
    %380 = vmatpush1.msra.mxu0 %v303
    %381 = vmatprep.subr.mxu0 %v306
    %382 = vmatpush1.msra.mxu0 %v305
    %383 = vmatprep.subr.mxu0 %v308
    %384 = vmatpush1.msra.mxu0 %v307
    %385 = vmatprep.subr.mxu0 %v310
    %386 = vmatpush1.msra.mxu0 %v309
    %387 = vmatprep.subr.mxu0 %v312
    %388 = vmatpush1.msra.mxu0 %v311
    %389 = vmatprep.subr.mxu0 %v314
    %390 = vmatpush1.msra.mxu0 %v313
    %391 = vmatprep.subr.mxu0 %v316
    %392 = vmatpush1.msra.mxu0 %v315
    %393 = vmatprep.subr.mxu0 %v318
    %394 = vmatpush1.msra.mxu0 %v317
    %395 = vmatprep.subr.mxu0 %v320
    %396 = vmatpush1.msra.mxu0 %v319
    %397 = vmatprep.subr.mxu0 %v322
    %398 = vmatpush1.msra.mxu0 %v321
    %399 = vmatprep.subr.mxu0 %v324
    %400 = vmatpush1.msra.mxu0 %v323
    %401 = vmatprep.subr.mxu0 %v326
    %402 = vmatpush1.msra.mxu0 %v325
    %403 = vmatprep.subr.mxu0 %v328
    %404 = vmatpush1.msra.mxu0 %v327
    %405 = vmatprep.subr.mxu0 %v330
    %406 = vmatpush1.msra.mxu0 %v329
    %407 = vmatprep.subr.mxu0 %v332
    %408 = vmatpush1.msra.mxu0 %v331
    %409 = vmatprep.subr.mxu0 %v334
    %410 = vmatpush1.msra.mxu0 %v333
    %411 = vmatprep.mubr.f32.mxu0 %v269
    %412 = vmatmul.mubr.f32.gmra.mrb[0].mxu0 %v268
    %v413 = vpop.f32.mrb[0].mxu0
    %v414 = vadd.f32 %v340, %v413
    %v415 = vpop.f32.mrb[0].mxu0
    %v416 = vadd.f32 %v344, %v415
    %417 = vdwg.mxu0
    %v418 = vtanh.pop %v414
    %v419 = vtanh.pop %v416
    %v420 = vld [vmem:[#allocation8] sm:$0xff]
    %v421 = vld [vmem:[#allocation8 + $0x8] sm:$0xff]
    %v422 = vld [vmem:[#allocation8 + $0x10] sm:$0xff]
    %v423 = vld [vmem:[#allocation8 + $0x18] sm:$0xff]
    %v424 = vld [vmem:[#allocation8 + $0x20] sm:$0xff]
    %v425 = vld [vmem:[#allocation8 + $0x28] sm:$0xff]
    %v426 = vld [vmem:[#allocation8 + $0x30] sm:$0xff]
    %v427 = vld [vmem:[#allocation8 + $0x38] sm:$0xff]
    %v428 = vld [vmem:[#allocation8 + $0x40] sm:$0xff]
    %v429 = vld [vmem:[#allocation8 + $0x48] sm:$0xff]
    %v430 = vld [vmem:[#allocation8 + $0x50] sm:$0xff]
    %v431 = vld [vmem:[#allocation8 + $0x58] sm:$0xff]
    %v432 = vld [vmem:[#allocation8 + $0x60] sm:$0xff]
    %v433 = vld [vmem:[#allocation8 + $0x68] sm:$0xff]
    %v434 = vld [vmem:[#allocation8 + $0x70] sm:$0xff]
    %v435 = vld [vmem:[#allocation8 + $0x78] sm:$0xff]
    %v436 = vld [vmem:[%s6] sm:$0x1]
    %v438 = vlaneseq
    %v439 = vshrl.u32 %v438, 7
    %v440 = vsub.s32 0, %v439
    %v441 = vrot.slane %v436, %v440
    %443 = vmatprep.subr.mxu0 0.0
    %444 = vmatpush1.msra.mxu0 %v420
    %445 = vmatprep.subr.mxu0 0.0
    %446 = vmatpush1.msra.mxu0 %v421
    %447 = vmatprep.subr.mxu0 0.0
    %448 = vmatpush1.msra.mxu0 %v422
    %449 = vmatprep.subr.mxu0 0.0
    %450 = vmatpush1.msra.mxu0 %v423
    %451 = vmatprep.subr.mxu0 0.0
    %452 = vmatpush1.msra.mxu0 %v424
    %453 = vmatprep.subr.mxu0 0.0
    %454 = vmatpush1.msra.mxu0 %v425
    %455 = vmatprep.subr.mxu0 0.0
    %456 = vmatpush1.msra.mxu0 %v426
    %457 = vmatprep.subr.mxu0 0.0
    %458 = vmatpush1.msra.mxu0 %v427
    %459 = vmatprep.subr.mxu0 0.0
    %460 = vmatpush1.msra.mxu0 %v428
    %461 = vmatprep.subr.mxu0 0.0
    %462 = vmatpush1.msra.mxu0 %v429
    %463 = vmatprep.subr.mxu0 0.0
    %464 = vmatpush1.msra.mxu0 %v430
    %465 = vmatprep.subr.mxu0 0.0
    %466 = vmatpush1.msra.mxu0 %v431
    %467 = vmatprep.subr.mxu0 0.0
    %468 = vmatpush1.msra.mxu0 %v432
    %469 = vmatprep.subr.mxu0 0.0
    %470 = vmatpush1.msra.mxu0 %v433
    %471 = vmatprep.subr.mxu0 0.0
    %472 = vmatpush1.msra.mxu0 %v434
    %473 = vmatprep.subr.mxu0 0.0
    %474 = vmatpush1.msra.mxu0 %v435
    %475 = vmatprep.subr.mxu0 0.0
    %476 = vmatpush1.msra.mxu0 0.0
    %477 = vmatprep.subr.mxu0 0.0
    %478 = vmatpush1.msra.mxu0 0.0
    %479 = vmatprep.subr.mxu0 0.0
    %480 = vmatpush1.msra.mxu0 0.0
    %481 = vmatprep.subr.mxu0 0.0
    %482 = vmatpush1.msra.mxu0 0.0
    %483 = vmatprep.subr.mxu0 0.0
    %484 = vmatpush1.msra.mxu0 0.0
    %485 = vmatprep.subr.mxu0 0.0
    %486 = vmatpush1.msra.mxu0 0.0
    %487 = vmatprep.subr.mxu0 0.0
    %488 = vmatpush1.msra.mxu0 0.0
    %489 = vmatprep.subr.mxu0 0.0
    %490 = vmatpush1.msra.mxu0 0.0
    %491 = vmatprep.subr.mxu0 0.0
    %492 = vmatpush1.msra.mxu0 0.0
    %493 = vmatprep.subr.mxu0 0.0
    %494 = vmatpush1.msra.mxu0 0.0
    %495 = vmatprep.subr.mxu0 0.0
    %496 = vmatpush1.msra.mxu0 0.0
    %497 = vmatprep.subr.mxu0 0.0
    %498 = vmatpush1.msra.mxu0 0.0
    %499 = vmatprep.subr.mxu0 0.0
    %500 = vmatpush1.msra.mxu0 0.0
    %501 = vmatprep.subr.mxu0 0.0
    %502 = vmatpush1.msra.mxu0 0.0
    %503 = vmatprep.subr.mxu0 0.0
    %504 = vmatpush1.msra.mxu0 0.0
    %505 = vmatprep.subr.mxu0 0.0
    %506 = vmatpush1.msra.mxu0 0.0
    %507 = vmatprep.mubr.f32.mxu0 0.0
    %508 = vmatmul.mubr.f32.gmra.mrb[0].mxu0 %v270
    %v509 = vpop.f32.mrb[0].mxu0
    %v510 = vadd.f32 %v441, %v509
    %v511 = vpop.f32.mrb[0].mxu0
    %512 = vdwg.mxu0
    %v513 = vtanh.pop %v510
    %v514 = vld [vmem:[#allocation10] sm:$0xff]
    %v515 = vld [vmem:[#allocation10 + $0x8] sm:$0xff]
    %v516 = vld [vmem:[#allocation10 + $0x10] sm:$0xff]
    %v517 = vld [vmem:[#allocation10 + $0x18] sm:$0xff]
    %v518 = vld [vmem:[#allocation10 + $0x20] sm:$0xff]
    %v519 = vld [vmem:[#allocation10 + $0x28] sm:$0xff]
    %v520 = vld [vmem:[#allocation10 + $0x30] sm:$0xff]
    %v521 = vld [vmem:[#allocation10 + $0x38] sm:$0xff]
    %v522 = vld [vmem:[#allocation10 + $0x40] sm:$0xff]
    %v523 = vld [vmem:[#allocation10 + $0x48] sm:$0xff]
    %v524 = vld [vmem:[#allocation10 + $0x50] sm:$0xff]
    %v525 = vld [vmem:[#allocation10 + $0x58] sm:$0xff]
    %v526 = vld [vmem:[#allocation10 + $0x60] sm:$0xff]
    %v527 = vld [vmem:[#allocation10 + $0x68] sm:$0xff]
    %v528 = vld [vmem:[#allocation10 + $0x70] sm:$0xff]
    %v529 = vld [vmem:[#allocation10 + $0x78] sm:$0xff]
    %v530 = vld [vmem:[#allocation10 + $0x80] sm:$0xff]
    %v531 = vld [vmem:[#allocation10 + $0x88] sm:$0xff]
    %v532 = vld [vmem:[#allocation10 + $0x90] sm:$0xff]
    %v533 = vld [vmem:[#allocation10 + $0x98] sm:$0xff]
    %v534 = vld [vmem:[#allocation10 + $0xa0] sm:$0xff]
    %v535 = vld [vmem:[#allocation10 + $0xa8] sm:$0xff]
    %v536 = vld [vmem:[#allocation10 + $0xb0] sm:$0xff]
    %v537 = vld [vmem:[#allocation10 + $0xb8] sm:$0xff]
    %v538 = vld [vmem:[#allocation10 + $0xc0] sm:$0xff]
    %v539 = vld [vmem:[#allocation10 + $0xc8] sm:$0xff]
    %v540 = vld [vmem:[#allocation10 + $0xd0] sm:$0xff]
    %v541 = vld [vmem:[#allocation10 + $0xd8] sm:$0xff]
    %v542 = vld [vmem:[#allocation10 + $0xe0] sm:$0xff]
    %v543 = vld [vmem:[#allocation10 + $0xe8] sm:$0xff]
    %v544 = vld [vmem:[#allocation10 + $0xf0] sm:$0xff]
    %v545 = vld [vmem:[#allocation10 + $0xf8] sm:$0xff]
    %v546 = vld [vmem:[#allocation10 + $0x100] sm:$0xff]
    %v547 = vld [vmem:[#allocation10 + $0x108] sm:$0xff]
    %v548 = vld [vmem:[#allocation10 + $0x110] sm:$0xff]
    %v549 = vld [vmem:[#allocation10 + $0x118] sm:$0xff]
    %v550 = vld [vmem:[#allocation10 + $0x120] sm:$0xff]
    %v551 = vld [vmem:[#allocation10 + $0x128] sm:$0xff]
    %v552 = vld [vmem:[#allocation10 + $0x130] sm:$0xff]
    %v553 = vld [vmem:[#allocation10 + $0x138] sm:$0xff]
    %v554 = vld [vmem:[#allocation10 + $0x140] sm:$0xff]
    %v555 = vld [vmem:[#allocation10 + $0x148] sm:$0xff]
    %v556 = vld [vmem:[#allocation10 + $0x150] sm:$0xff]
    %v557 = vld [vmem:[#allocation10 + $0x158] sm:$0xff]
    %v558 = vld [vmem:[#allocation10 + $0x160] sm:$0xff]
    %v559 = vld [vmem:[#allocation10 + $0x168] sm:$0xff]
    %v560 = vld [vmem:[#allocation10 + $0x170] sm:$0xff]
    %v561 = vld [vmem:[#allocation10 + $0x178] sm:$0xff]
    %v562 = vld [vmem:[%s8] sm:$0x1]
    %v564 = vlaneseq
    %v565 = vshrl.u32 %v564, 7
    %v566 = vsub.s32 0, %v565
    %v567 = vrot.slane %v562, %v566
    %569 = vmatprep.subr.mxu0 0.0
    %570 = vmatpush1.msra.mxu0 %v514
    %571 = vmatprep.subr.mxu0 0.0
    %572 = vmatpush1.msra.mxu0 %v515
    %573 = vmatprep.subr.mxu0 0.0
    %574 = vmatpush1.msra.mxu0 %v516
    %575 = vmatprep.subr.mxu0 0.0
    %576 = vmatpush1.msra.mxu0 %v517
    %577 = vmatprep.subr.mxu0 0.0
    %578 = vmatpush1.msra.mxu0 %v518
    %579 = vmatprep.subr.mxu0 0.0
    %580 = vmatpush1.msra.mxu0 %v519
    %581 = vmatprep.subr.mxu0 0.0
    %582 = vmatpush1.msra.mxu0 %v520
    %583 = vmatprep.subr.mxu0 0.0
    %584 = vmatpush1.msra.mxu0 %v521
    %585 = vmatprep.subr.mxu0 0.0
    %586 = vmatpush1.msra.mxu0 %v522
    %587 = vmatprep.subr.mxu0 0.0
    %588 = vmatpush1.msra.mxu0 %v523
    %589 = vmatprep.subr.mxu0 0.0
    %590 = vmatpush1.msra.mxu0 %v524
    %591 = vmatprep.subr.mxu0 0.0
    %592 = vmatpush1.msra.mxu0 %v525
    %593 = vmatprep.subr.mxu0 0.0
    %594 = vmatpush1.msra.mxu0 %v526
    %595 = vmatprep.subr.mxu0 0.0
    %596 = vmatpush1.msra.mxu0 %v527
    %597 = vmatprep.subr.mxu0 0.0
    %598 = vmatpush1.msra.mxu0 %v528
    %599 = vmatprep.subr.mxu0 0.0
    %600 = vmatpush1.msra.mxu0 %v529
    %601 = vmatprep.subr.mxu0 0.0
    %602 = vmatpush1.msra.mxu0 %v530
    %603 = vmatprep.subr.mxu0 0.0
    %604 = vmatpush1.msra.mxu0 %v531
    %605 = vmatprep.subr.mxu0 0.0
    %606 = vmatpush1.msra.mxu0 %v532
    %607 = vmatprep.subr.mxu0 0.0
    %608 = vmatpush1.msra.mxu0 %v533
    %609 = vmatprep.subr.mxu0 0.0
    %610 = vmatpush1.msra.mxu0 %v534
    %611 = vmatprep.subr.mxu0 0.0
    %612 = vmatpush1.msra.mxu0 %v535
    %613 = vmatprep.subr.mxu0 0.0
    %614 = vmatpush1.msra.mxu0 %v536
    %615 = vmatprep.subr.mxu0 0.0
    %616 = vmatpush1.msra.mxu0 %v537
    %617 = vmatprep.subr.mxu0 0.0
    %618 = vmatpush1.msra.mxu0 %v538
    %619 = vmatprep.subr.mxu0 0.0
    %620 = vmatpush1.msra.mxu0 %v539
    %621 = vmatprep.subr.mxu0 0.0
    %622 = vmatpush1.msra.mxu0 %v540
    %623 = vmatprep.subr.mxu0 0.0
    %624 = vmatpush1.msra.mxu0 %v541
    %625 = vmatprep.subr.mxu0 0.0
    %626 = vmatpush1.msra.mxu0 %v542
    %627 = vmatprep.subr.mxu0 0.0
    %628 = vmatpush1.msra.mxu0 %v543
    %629 = vmatprep.subr.mxu0 0.0
    %630 = vmatpush1.msra.mxu0 %v544
    %631 = vmatprep.subr.mxu0 0.0
    %632 = vmatpush1.msra.mxu0 %v545
    %633 = vmatprep.mubr.f32.mxu0 %v419
    %634 = vmatmul.mubr.f32.gmra.mrb[0].mxu0 %v418
    %v635 = vpop.f32.mrb[0].mxu0
    %v636 = vadd.f32 %v567, %v635
    %v637 = vpop.f32.mrb[0].mxu0
    %638 = vdwg.mxu0
    %639 = vmatprep.subr.mxu0 0.0
    %640 = vmatpush1.msra.mxu0 %v546
    %641 = vmatprep.subr.mxu0 0.0
    %642 = vmatpush1.msra.mxu0 %v547
    %643 = vmatprep.subr.mxu0 0.0
    %644 = vmatpush1.msra.mxu0 %v548
    %645 = vmatprep.subr.mxu0 0.0
    %646 = vmatpush1.msra.mxu0 %v549
    %647 = vmatprep.subr.mxu0 0.0
    %648 = vmatpush1.msra.mxu0 %v550
    %649 = vmatprep.subr.mxu0 0.0
    %650 = vmatpush1.msra.mxu0 %v551
    %651 = vmatprep.subr.mxu0 0.0
    %652 = vmatpush1.msra.mxu0 %v552
    %653 = vmatprep.subr.mxu0 0.0
    %654 = vmatpush1.msra.mxu0 %v553
    %655 = vmatprep.subr.mxu0 0.0
    %656 = vmatpush1.msra.mxu0 %v554
    %657 = vmatprep.subr.mxu0 0.0
    %658 = vmatpush1.msra.mxu0 %v555
    %659 = vmatprep.subr.mxu0 0.0
    %660 = vmatpush1.msra.mxu0 %v556
    %661 = vmatprep.subr.mxu0 0.0
    %662 = vmatpush1.msra.mxu0 %v557
    %663 = vmatprep.subr.mxu0 0.0
    %664 = vmatpush1.msra.mxu0 %v558
    %665 = vmatprep.subr.mxu0 0.0
    %666 = vmatpush1.msra.mxu0 %v559
    %667 = vmatprep.subr.mxu0 0.0
    %668 = vmatpush1.msra.mxu0 %v560
    %669 = vmatprep.subr.mxu0 0.0
    %670 = vmatpush1.msra.mxu0 %v561
    %671 = vmatprep.subr.mxu0 0.0
    %672 = vmatpush1.msra.mxu0 0.0
    %673 = vmatprep.subr.mxu0 0.0
    %674 = vmatpush1.msra.mxu0 0.0
    %675 = vmatprep.subr.mxu0 0.0
    %676 = vmatpush1.msra.mxu0 0.0
    %677 = vmatprep.subr.mxu0 0.0
    %678 = vmatpush1.msra.mxu0 0.0
    %679 = vmatprep.subr.mxu0 0.0
    %680 = vmatpush1.msra.mxu0 0.0
    %681 = vmatprep.subr.mxu0 0.0
    %682 = vmatpush1.msra.mxu0 0.0
    %683 = vmatprep.subr.mxu0 0.0
    %684 = vmatpush1.msra.mxu0 0.0
    %685 = vmatprep.subr.mxu0 0.0
    %686 = vmatpush1.msra.mxu0 0.0
    %687 = vmatprep.subr.mxu0 0.0
    %688 = vmatpush1.msra.mxu0 0.0
    %689 = vmatprep.subr.mxu0 0.0
    %690 = vmatpush1.msra.mxu0 0.0
    %691 = vmatprep.subr.mxu0 0.0
    %692 = vmatpush1.msra.mxu0 0.0
    %693 = vmatprep.subr.mxu0 0.0
    %694 = vmatpush1.msra.mxu0 0.0
    %695 = vmatprep.subr.mxu0 0.0
    %696 = vmatpush1.msra.mxu0 0.0
    %697 = vmatprep.subr.mxu0 0.0
    %698 = vmatpush1.msra.mxu0 0.0
    %699 = vmatprep.subr.mxu0 0.0
    %700 = vmatpush1.msra.mxu0 0.0
    %701 = vmatprep.subr.mxu0 0.0
    %702 = vmatpush1.msra.mxu0 0.0
    %703 = vmatprep.mubr.f32.mxu0 0.0
    %704 = vmatmul.mubr.f32.gmra.mrb[0].mxu0 %v513
    %v705 = vpop.f32.mrb[0].mxu0
    %v706 = vadd.f32 %v636, %v705
    %v707 = vpop.f32.mrb[0].mxu0
    %708 = vdwg.mxu0
    %v709 = vlaneseq
    %v710 = vand.u32 %v709, 127
    %vm711 = vcmp.lt.s32.totalorder %v710, 8
    %v712 = vtanh.pop %v706
    %v713 = vsel %vm711, %v712, -inf
    %714 = vmax.xlane.f32.xlu0 %v713
    %v715 = vpop.xlane.xlu0 %714
    %v716 = vsub.f32 %v713, %v715
    %v717 = vmul.f32 %v716, 1.442695
    %v718 = vpow.pop %v717
    %v719 = vsel %vm711, %v718, 0.0
    %720 = vadd.xlane.f32.xlu0 %v719
    %v721 = vpop.xlane.xlu0 %720
    %v722 = vrcp.pop %v721
    %v723 = vmul.f32 %v719, %v722
    %vm724 = vcmp.eq.s32.totalorder %v710, 8
    %v725 = vsel %vm724, %v706, 0.0
    %v726 = vsel %vm711, %v723, %v725
    %727 = vst [vmem:[#allocation11] sm:$0xff] %v726
    // Predicated region
    $region58: #{tpu_custom_call.1} parent=1 // pred_check
      _
    $region59: #{tpu_custom_call.1} parent=1 // pred_check_branch
      %729 = sbr.rel (0) target = $region61
    $region60: #{tpu_custom_call.1} parent=1 // pred_region
      %s731 = ssub.s32 128, 128
      %732 = vsyncadd [#allocation4], %s731
      %s734 = sshll.u32 [#allocation11], 4
      %s735 = int_to_ptr.vmem [resolvable:$true] %s734
      %737 = dma.vmem_to_hbm [thread:$0]  %s735, 128, %s9, [#allocation4]
    $region61: #{tpu_custom_call.1} parent=1 // pred_fallthru
      _
    // Predicated region
    $region62: #{tpu_custom_call.1} parent=1 // pred_check
      _
    $region63: #{tpu_custom_call.1} parent=1 // pred_check_branch
      %739 = sbr.rel (0) target = $region65
    $region64: #{tpu_custom_call.1} parent=1 // pred_region
      %740 = dma.done [#allocation4], 128
    $region65: #{tpu_custom_call.1} parent=1 // pred_fallthru
      _
    %741 = vsyncpa [#allocation3], 1
    %742 = vsyncpa [#allocation6], 1
    %743 = vsyncpa [#allocation9], 1
    %744 = vsyncpa [#allocation4], 1

</llo_original>
